<compile_context>
chip_gen: v7x
topology: tpu7x:2x2x1
jax: 0.10.0
libtpu: 0.0.40
codegen_flags: <defaults>
</compile_context>

<pallas_src>
import jax
import jax.numpy as jnp
from jax.experimental import pallas as pl
from jax.experimental.pallas import tpu as pltpu


def classifier_head_kernel(x_ref, w1_ref, b1_ref, w2_ref, b2_ref, o_ref):
    x = x_ref[...].astype(jnp.float32)          # (tb, base_dim=3)
    w1 = w1_ref[...].astype(jnp.float32)        # (base_dim, mid_dim)
    b1 = b1_ref[...].astype(jnp.float32)        # (1, mid_dim)

    # fc1 on the (otherwise idle) MXU; K=3 is padded but hides under GELU/fc2.
    h = jnp.dot(x, w1, preferred_element_type=jnp.float32) + b1

    # Dropout(p=0.2) in eval mode == identity.

    # Exact (erf-based) GELU, matching torch.nn.GELU default.
    g = 0.5 * h * (1.0 + jax.lax.erf(h * jnp.float32(0.7071067811865476)))

    # fc2 on the MXU: (tb, mid) @ (mid, num_classes).
    out = jnp.dot(g, w2_ref[...].astype(jnp.float32),
                  preferred_element_type=jnp.float32)
    out = out + b2_ref[...].astype(jnp.float32)
    o_ref[...] = out.astype(o_ref.dtype)


def _round_up(a, m):
    return ((a + m - 1) // m) * m


def classifier_head(x, w1, b1, w2, b2, *, max_tb=2048):
    """x: (B, base_dim); w1: (base_dim, mid); b1: (1, mid); w2: (mid, nc); b2: (1, nc)."""
    B, base_dim = x.shape
    mid_dim = w1.shape[1]
    num_classes = w2.shape[1]
    dtype = x.dtype

    # Batch tiling: multiple-of-8 row tiles.  For B > 16, force >= 2 grid steps so
    # both v7x TensorCores get work under the "parallel" batch axis.
    if B > 16:
        tb = min(max_tb, _round_up((B + 1) // 2, 8))
    else:
        tb = min(max_tb, _round_up(B, 8))
    b_pad = _round_up(B, tb)
    if b_pad != B:
        x = jnp.zeros((b_pad, base_dim), dtype).at[:B, :].set(x)

    grid = (b_pad // tb,)
    out_padded = pl.pallas_call(
        classifier_head_kernel,
        out_shape=jax.ShapeDtypeStruct((b_pad, num_classes), dtype),
        grid_spec=pltpu.PrefetchScalarGridSpec(
            num_scalar_prefetch=0,
            grid=grid,
            in_specs=[
                # Activations stream over the batch grid.
                pl.BlockSpec((tb, base_dim), lambda i: (i, 0)),
                # Weights/biases stay resident in VMEM across all grid steps.
                pl.BlockSpec((base_dim, mid_dim), lambda i: (0, 0)),
                pl.BlockSpec((1, mid_dim), lambda i: (0, 0)),
                pl.BlockSpec((mid_dim, num_classes), lambda i: (0, 0)),
                pl.BlockSpec((1, num_classes), lambda i: (0, 0)),
            ],
            out_specs=pl.BlockSpec((tb, num_classes), lambda i: (i, 0)),
        ),
        compiler_params=pltpu.CompilerParams(
            dimension_semantics=("parallel",),  # v7x: both TCs split the batch grid
        ),
    )(x, w1, b1, w2, b2)

    # Only the row slice remains (no-op when B % tb == 0).
    return out_padded[:B]


if __name__ == "__main__":
    base_dim, mid_dim, num_classes = 3, 64, 18
    batch = 8

    key = jax.random.PRNGKey(0)
    kx, kw1, kb1, kw2, kb2 = jax.random.split(key, 5)

    # Deterministic parameter init (shapes per module __init__).
    x = jax.random.normal(kx, (batch, base_dim), dtype=jnp.float32)
    w1 = jax.random.normal(kw1, (base_dim, mid_dim), dtype=jnp.float32) * 0.1
    b1 = jax.random.normal(kb1, (1, mid_dim), dtype=jnp.float32) * 0.01
    w2 = jax.random.normal(kw2, (mid_dim, num_classes), dtype=jnp.float32) * 0.1
    b2 = jax.random.normal(kb2, (1, num_classes), dtype=jnp.float32) * 0.01

    out = classifier_head(x, w1, b1, w2, b2)
    jax.block_until_ready(out)

    # Reference check in plain JAX (same eval-mode semantics).
    h = x @ w1 + b1
    g = 0.5 * h * (1.0 + jax.lax.erf(h / jnp.sqrt(2.0)))
    ref = g @ w2 + b2
    assert out.shape == (batch, num_classes)
    assert jnp.allclose(out, ref, atol=1e-5, rtol=1e-5)

    print("KERNEL_OK")
</pallas_src>

<mosaic_0001>
module attributes {stable_mosaic.version = 11 : i64} {
  func.func @classifier_head_kernel(%arg0: i32, %arg1: memref<8x3xf32, #tpu.memory_space<vmem>>, %arg2: memref<3x64xf32, #tpu.memory_space<vmem>>, %arg3: memref<1x64xf32, #tpu.memory_space<vmem>>, %arg4: memref<64x18xf32, #tpu.memory_space<vmem>>, %arg5: memref<1x18xf32, #tpu.memory_space<vmem>>, %arg6: memref<8x18xf32, #tpu.memory_space<vmem>>) attributes {dimension_semantics = [#tpu.dimension_semantics<parallel>], iteration_bounds = array<i64: 1>, scalar_prefetch = 0 : i64, scratch_operands = 0 : i64, tpu.core_type = #tpu.core_type<tc>, window_params = [{transform_indices = @transform_0, window_bounds = array<i64: 8, 3>}, {pipeline_mode = #tpu.pipeline_mode<synchronous>, transform_indices = @transform_1, window_bounds = array<i64: 3, 64>}, {pipeline_mode = #tpu.pipeline_mode<synchronous>, transform_indices = @transform_2, window_bounds = array<i64: 1, 64>}, {pipeline_mode = #tpu.pipeline_mode<synchronous>, transform_indices = @transform_3, window_bounds = array<i64: 64, 18>}, {pipeline_mode = #tpu.pipeline_mode<synchronous>, transform_indices = @transform_4, window_bounds = array<i64: 1, 18>}, {transform_indices = @transform_5, window_bounds = array<i64: 8, 18>}]} {
    %c0 = arith.constant 0 : index
    %c0_0 = arith.constant 0 : index
    %0 = vector.load %arg1[%c0, %c0_0] : memref<8x3xf32, #tpu.memory_space<vmem>>, vector<8x3xf32>
    %c0_1 = arith.constant 0 : index
    %c0_2 = arith.constant 0 : index
    %1 = vector.load %arg2[%c0_1, %c0_2] : memref<3x64xf32, #tpu.memory_space<vmem>>, vector<3x64xf32>
    %c0_3 = arith.constant 0 : index
    %c0_4 = arith.constant 0 : index
    %2 = vector.load %arg3[%c0_3, %c0_4] : memref<1x64xf32, #tpu.memory_space<vmem>>, vector<1x64xf32>
    %cst = arith.constant dense<0.000000e+00> : vector<8x64xf32>
    %3 = tpu.matmul %0, %1, %cst {dimension_numbers = #tpu.dot_dimension_numbers<[1], [0], [0], [1], [0, 0, 1, 1], [], []>} : vector<8x3xf32>, vector<3x64xf32>, vector<8x64xf32> -> vector<8x64xf32>
    %4 = vector.broadcast %2 : vector<1x64xf32> to vector<8x64xf32>
    %5 = arith.addf %3, %4 : vector<8x64xf32>
    %cst_5 = arith.constant 5.000000e-01 : f32
    %6 = vector.broadcast %cst_5 : f32 to vector<8x64xf32>
    %7 = arith.mulf %6, %5 : vector<8x64xf32>
    %cst_6 = arith.constant 0.707106769 : f32
    %8 = vector.broadcast %cst_6 : f32 to vector<8x64xf32>
    %9 = arith.mulf %5, %8 : vector<8x64xf32>
    %10 = math.erf %9 : vector<8x64xf32>
    %cst_7 = arith.constant 1.000000e+00 : f32
    %11 = vector.broadcast %cst_7 : f32 to vector<8x64xf32>
    %12 = arith.addf %11, %10 : vector<8x64xf32>
    %13 = arith.mulf %7, %12 : vector<8x64xf32>
    %c0_8 = arith.constant 0 : index
    %c0_9 = arith.constant 0 : index
    %14 = vector.load %arg4[%c0_8, %c0_9] : memref<64x18xf32, #tpu.memory_space<vmem>>, vector<64x18xf32>
    %cst_10 = arith.constant dense<0.000000e+00> : vector<8x18xf32>
    %15 = tpu.matmul %13, %14, %cst_10 {dimension_numbers = #tpu.dot_dimension_numbers<[1], [0], [0], [1], [0, 0, 1, 1], [], []>} : vector<8x64xf32>, vector<64x18xf32>, vector<8x18xf32> -> vector<8x18xf32>
    %c0_11 = arith.constant 0 : index
    %c0_12 = arith.constant 0 : index
    %16 = vector.load %arg5[%c0_11, %c0_12] : memref<1x18xf32, #tpu.memory_space<vmem>>, vector<1x18xf32>
    %17 = vector.broadcast %16 : vector<1x18xf32> to vector<8x18xf32>
    %18 = arith.addf %15, %17 : vector<8x18xf32>
    %c0_13 = arith.constant 0 : index
    %c0_14 = arith.constant 0 : index
    %19 = vector.load %arg6[%c0_13, %c0_14] : memref<8x18xf32, #tpu.memory_space<vmem>>, vector<8x18xf32>
    tpu.vector_store %arg6[%c0_13, %c0_14], %18 {strides = array<i32>} : memref<8x18xf32, #tpu.memory_space<vmem>>, vector<8x18xf32>,
    return
  }
  func.func @transform_0(%arg0: i32) -> (i32, i32) {
    %c0_i32 = arith.constant 0 : i32
    %c0_i32_0 = arith.constant 0 : i32
    return %arg0, %c0_i32 : i32, i32
  }
  func.func @transform_1(%arg0: i32) -> (i32, i32) {
    %c0_i32 = arith.constant 0 : i32
    %c0_i32_0 = arith.constant 0 : i32
    %c0_i32_1 = arith.constant 0 : i32
    return %c0_i32, %c0_i32_0 : i32, i32
  }
  func.func @transform_2(%arg0: i32) -> (i32, i32) {
    %c0_i32 = arith.constant 0 : i32
    %c0_i32_0 = arith.constant 0 : i32
    %c0_i32_1 = arith.constant 0 : i32
    return %c0_i32, %c0_i32_0 : i32, i32
  }
  func.func @transform_3(%arg0: i32) -> (i32, i32) {
    %c0_i32 = arith.constant 0 : i32
    %c0_i32_0 = arith.constant 0 : i32
    %c0_i32_1 = arith.constant 0 : i32
    return %c0_i32, %c0_i32_0 : i32, i32
  }
  func.func @transform_4(%arg0: i32) -> (i32, i32) {
    %c0_i32 = arith.constant 0 : i32
    %c0_i32_0 = arith.constant 0 : i32
    %c0_i32_1 = arith.constant 0 : i32
    return %c0_i32, %c0_i32_0 : i32, i32
  }
  func.func @transform_5(%arg0: i32) -> (i32, i32) {
    %c0_i32 = arith.constant 0 : i32
    %c0_i32_0 = arith.constant 0 : i32
    return %arg0, %c0_i32 : i32, i32
  }
}

</mosaic_0001>

<llo_original>
// kernel: tpu_custom_call.1
$region0: #{tpu_custom_call.1}
  #allocation0 [shape = 'u32[]', space=smem, size = 0x4, offset = 0x4, fixed_abs, tag = 'smem constant byte address 0x4 - core index']
  #allocation1 [shape = 'u32[144,128]{1,0:T(1,128)}', space=vmem, size = 0x12000, scoped, tag = 'internal scratch']
  %s0 = inlined_call_operand.vmem [shape: f32[8,3], index: 0, kind: input, shape index: {}]
  %s1 = inlined_call_operand.vmem [shape: f32[3,64], index: 1, kind: input, shape index: {}]
  %s2 = inlined_call_operand.vmem [shape: f32[1,64], index: 2, kind: input, shape index: {}]
  %s3 = inlined_call_operand.vmem [shape: f32[64,18], index: 3, kind: input, shape index: {}]
  %s4 = inlined_call_operand.vmem [shape: f32[1,18], index: 4, kind: input, shape index: {}]
  %s5 = inlined_call_operand.hbm [shape: f32[8,18], index: 5, kind: output, shape index: {}]
  %s6 = sld [smem:[#allocation0]]
  $region30: #{tpu_custom_call.1} parent=0
    _
  %s8 = ssub.s32 1, %s6
  %s9 = scalar_select 0, %s8, %s6
  $region1: #{tpu_custom_call.1} parent=0
    #allocation2 [shape = 'u8[4096]{0}', space=vmem, size = 0x1000, scoped, tag = 'output window, operand 0, single buffered']
    #allocation3 [shape = 's32[1]{0}', space=sflag, size = 0x4, scoped, tag = 'scoped memory for tpu_custom_call.1']
    %10 = vsyncpa [#allocation3], 0
    // Predicated region
    $region2: #{tpu_custom_call.1} parent=1 // pred_check
      _
    $region3: #{tpu_custom_call.1} parent=1 // pred_check_branch
      %12 = sbr.rel (0) target = $region5
    $region4: #{tpu_custom_call.1} parent=1 // pred_region
      _
    $region5: #{tpu_custom_call.1} parent=1 // pred_fallthru
      _
    // Predicated region
    $region6: #{tpu_custom_call.1} parent=1 // pred_check
      _
    $region7: #{tpu_custom_call.1} parent=1 // pred_check_branch
      %14 = sbr.rel (0) target = $region9
    $region8: #{tpu_custom_call.1} parent=1 // pred_region
      _
    $region9: #{tpu_custom_call.1} parent=1 // pred_fallthru
      _
    // Predicated region
    $region10: #{tpu_custom_call.1} parent=1 // pred_check
      _
    $region11: #{tpu_custom_call.1} parent=1 // pred_check_branch
      %16 = sbr.rel (0) target = $region13
    $region12: #{tpu_custom_call.1} parent=1 // pred_region
      _
    $region13: #{tpu_custom_call.1} parent=1 // pred_fallthru
      _
    // Predicated region
    $region14: #{tpu_custom_call.1} parent=1 // pred_check
      _
    $region15: #{tpu_custom_call.1} parent=1 // pred_check_branch
      %18 = sbr.rel (0) target = $region17
    $region16: #{tpu_custom_call.1} parent=1 // pred_region
      _
    $region17: #{tpu_custom_call.1} parent=1 // pred_fallthru
      _
    // Predicated region
    $region18: #{tpu_custom_call.1} parent=1 // pred_check
      _
    $region19: #{tpu_custom_call.1} parent=1 // pred_check_branch
      %20 = sbr.rel (0) target = $region21
    $region20: #{tpu_custom_call.1} parent=1 // pred_region
      _
    $region21: #{tpu_custom_call.1} parent=1 // pred_fallthru
      _
    %v21 = vld [vmem:[%s0] sm:$0xff]
    %v22 = vld [vmem:[%s1] sm:$0x7]
    %v23 = vld [vmem:[%s2] sm:$0x1]
    %v25 = vlaneseq
    %v26 = vshrl.u32 %v25, 7
    %v27 = vsub.s32 0, %v26
    %v28 = vrot.slane %v23, %v27
    %vm30 = vcmask 23552
    %v32 = vsel %vm30, %v21, 0
    %vm34 = vcmask 1042432
    %v36 = vsel %vm34, %v22, 0
    %38 = vmatprep.subr.mxu0 0.0
    %39 = vmatpush1.msra.mxu0 %v36
    %40 = vmatprep.subr.mxu0 0.0
    %41 = vmatpush1.msra.mxu0 0.0
    %42 = vmatprep.subr.mxu0 0.0
    %43 = vmatpush1.msra.mxu0 0.0
    %44 = vmatprep.subr.mxu0 0.0
    %45 = vmatpush1.msra.mxu0 0.0
    %46 = vmatprep.subr.mxu0 0.0
    %47 = vmatpush1.msra.mxu0 0.0
    %48 = vmatprep.subr.mxu0 0.0
    %49 = vmatpush1.msra.mxu0 0.0
    %50 = vmatprep.subr.mxu0 0.0
    %51 = vmatpush1.msra.mxu0 0.0
    %52 = vmatprep.subr.mxu0 0.0
    %53 = vmatpush1.msra.mxu0 0.0
    %54 = vmatprep.subr.mxu0 0.0
    %55 = vmatpush1.msra.mxu0 0.0
    %56 = vmatprep.subr.mxu0 0.0
    %57 = vmatpush1.msra.mxu0 0.0
    %58 = vmatprep.subr.mxu0 0.0
    %59 = vmatpush1.msra.mxu0 0.0
    %60 = vmatprep.subr.mxu0 0.0
    %61 = vmatpush1.msra.mxu0 0.0
    %62 = vmatprep.subr.mxu0 0.0
    %63 = vmatpush1.msra.mxu0 0.0
    %64 = vmatprep.subr.mxu0 0.0
    %65 = vmatpush1.msra.mxu0 0.0
    %66 = vmatprep.subr.mxu0 0.0
    %67 = vmatpush1.msra.mxu0 0.0
    %68 = vmatprep.subr.mxu0 0.0
    %69 = vmatpush1.msra.mxu0 0.0
    %70 = vmatprep.subr.mxu0 0.0
    %71 = vmatpush1.msra.mxu0 0.0
    %72 = vmatprep.subr.mxu0 0.0
    %73 = vmatpush1.msra.mxu0 0.0
    %74 = vmatprep.subr.mxu0 0.0
    %75 = vmatpush1.msra.mxu0 0.0
    %76 = vmatprep.subr.mxu0 0.0
    %77 = vmatpush1.msra.mxu0 0.0
    %78 = vmatprep.subr.mxu0 0.0
    %79 = vmatpush1.msra.mxu0 0.0
    %80 = vmatprep.subr.mxu0 0.0
    %81 = vmatpush1.msra.mxu0 0.0
    %82 = vmatprep.subr.mxu0 0.0
    %83 = vmatpush1.msra.mxu0 0.0
    %84 = vmatprep.subr.mxu0 0.0
    %85 = vmatpush1.msra.mxu0 0.0
    %86 = vmatprep.subr.mxu0 0.0
    %87 = vmatpush1.msra.mxu0 0.0
    %88 = vmatprep.subr.mxu0 0.0
    %89 = vmatpush1.msra.mxu0 0.0
    %90 = vmatprep.subr.mxu0 0.0
    %91 = vmatpush1.msra.mxu0 0.0
    %92 = vmatprep.subr.mxu0 0.0
    %93 = vmatpush1.msra.mxu0 0.0
    %94 = vmatprep.subr.mxu0 0.0
    %95 = vmatpush1.msra.mxu0 0.0
    %96 = vmatprep.subr.mxu0 0.0
    %97 = vmatpush1.msra.mxu0 0.0
    %98 = vmatprep.subr.mxu0 0.0
    %99 = vmatpush1.msra.mxu0 0.0
    %100 = vmatprep.subr.mxu0 0.0
    %101 = vmatpush1.msra.mxu0 0.0
    %102 = vmatprep.mubr.f32.mxu0 0.0
    %103 = vmatmul.mubr.f32.gmra.mrb[0].mxu0 %v32
    %v104 = vpop.f32.mrb[0].mxu0
    %v105 = vadd.f32 %v28, %v104
    %v106 = vpop.f32.mrb[0].mxu0
    %107 = vdwg.mxu0
    %v108 = vmul.f32 %v105, 0.5
    %v109 = vmul.f32 %v105, 0.70710677
    %v110 = verf.f32.pop %v109
    %v111 = vadd.f32 %v110, 1.0
    %v112 = vmul.f32 %v108, %v111
    %v113 = vld [vmem:[%s3] sm:$0xff]
    %v114 = vld [vmem:[%s3 + $0x8] sm:$0xff]
    %v115 = vld [vmem:[%s3 + $0x10] sm:$0xff]
    %v116 = vld [vmem:[%s3 + $0x18] sm:$0xff]
    %v117 = vld [vmem:[%s3 + $0x20] sm:$0xff]
    %v118 = vld [vmem:[%s3 + $0x28] sm:$0xff]
    %v119 = vld [vmem:[%s3 + $0x30] sm:$0xff]
    %v120 = vld [vmem:[%s3 + $0x38] sm:$0xff]
    %v121 = vld [vmem:[%s4] sm:$0x1]
    %v123 = vlaneseq
    %v124 = vshrl.u32 %v123, 7
    %v125 = vsub.s32 0, %v124
    %v126 = vrot.slane %v121, %v125
    %vm128 = vcmask 523264
    %v130 = vsel %vm128, %v112, 0
    %132 = vmatprep.subr.mxu0 0.0
    %133 = vmatpush1.msra.mxu0 %v113
    %134 = vmatprep.subr.mxu0 0.0
    %135 = vmatpush1.msra.mxu0 %v114
    %136 = vmatprep.subr.mxu0 0.0
    %137 = vmatpush1.msra.mxu0 %v115
    %138 = vmatprep.subr.mxu0 0.0
    %139 = vmatpush1.msra.mxu0 %v116
    %140 = vmatprep.subr.mxu0 0.0
    %141 = vmatpush1.msra.mxu0 %v117
    %142 = vmatprep.subr.mxu0 0.0
    %143 = vmatpush1.msra.mxu0 %v118
    %144 = vmatprep.subr.mxu0 0.0
    %145 = vmatpush1.msra.mxu0 %v119
    %146 = vmatprep.subr.mxu0 0.0
    %147 = vmatpush1.msra.mxu0 %v120
    %148 = vmatprep.subr.mxu0 0.0
    %149 = vmatpush1.msra.mxu0 0.0
    %150 = vmatprep.subr.mxu0 0.0
    %151 = vmatpush1.msra.mxu0 0.0
    %152 = vmatprep.subr.mxu0 0.0
    %153 = vmatpush1.msra.mxu0 0.0
    %154 = vmatprep.subr.mxu0 0.0
    %155 = vmatpush1.msra.mxu0 0.0
    %156 = vmatprep.subr.mxu0 0.0
    %157 = vmatpush1.msra.mxu0 0.0
    %158 = vmatprep.subr.mxu0 0.0
    %159 = vmatpush1.msra.mxu0 0.0
    %160 = vmatprep.subr.mxu0 0.0
    %161 = vmatpush1.msra.mxu0 0.0
    %162 = vmatprep.subr.mxu0 0.0
    %163 = vmatpush1.msra.mxu0 0.0
    %164 = vmatprep.subr.mxu0 0.0
    %165 = vmatpush1.msra.mxu0 0.0
    %166 = vmatprep.subr.mxu0 0.0
    %167 = vmatpush1.msra.mxu0 0.0
    %168 = vmatprep.subr.mxu0 0.0
    %169 = vmatpush1.msra.mxu0 0.0
    %170 = vmatprep.subr.mxu0 0.0
    %171 = vmatpush1.msra.mxu0 0.0
    %172 = vmatprep.subr.mxu0 0.0
    %173 = vmatpush1.msra.mxu0 0.0
    %174 = vmatprep.subr.mxu0 0.0
    %175 = vmatpush1.msra.mxu0 0.0
    %176 = vmatprep.subr.mxu0 0.0
    %177 = vmatpush1.msra.mxu0 0.0
    %178 = vmatprep.subr.mxu0 0.0
    %179 = vmatpush1.msra.mxu0 0.0
    %180 = vmatprep.subr.mxu0 0.0
    %181 = vmatpush1.msra.mxu0 0.0
    %182 = vmatprep.subr.mxu0 0.0
    %183 = vmatpush1.msra.mxu0 0.0
    %184 = vmatprep.subr.mxu0 0.0
    %185 = vmatpush1.msra.mxu0 0.0
    %186 = vmatprep.subr.mxu0 0.0
    %187 = vmatpush1.msra.mxu0 0.0
    %188 = vmatprep.subr.mxu0 0.0
    %189 = vmatpush1.msra.mxu0 0.0
    %190 = vmatprep.subr.mxu0 0.0
    %191 = vmatpush1.msra.mxu0 0.0
    %192 = vmatprep.subr.mxu0 0.0
    %193 = vmatpush1.msra.mxu0 0.0
    %194 = vmatprep.subr.mxu0 0.0
    %195 = vmatpush1.msra.mxu0 0.0
    %196 = vmatprep.mubr.f32.mxu0 0.0
    %197 = vmatmul.mubr.f32.gmra.mrb[0].mxu0 %v130
    %v198 = vpop.f32.mrb[0].mxu0
    %v199 = vadd.f32 %v126, %v198
    %v200 = vpop.f32.mrb[0].mxu0
    %201 = vdwg.mxu0
    %vm202 = vcmask 146432
    %203 = vst.msk [vmem:[#allocation2] sm:$0xff] %vm202, %v199
    // Predicated region
    $region22: #{tpu_custom_call.1} parent=1 // pred_check
      _
    $region23: #{tpu_custom_call.1} parent=1 // pred_check_branch
      %205 = sbr.rel (0) target = $region25
    $region24: #{tpu_custom_call.1} parent=1 // pred_region
      %s207 = ssub.s32 128, 128
      %208 = vsyncadd [#allocation3], %s207
      %s210 = sshll.u32 [#allocation2], 4
      %s211 = int_to_ptr.vmem [resolvable:$true] %s210
      %213 = dma.vmem_to_hbm [thread:$0]  %s211, 128, %s5, [#allocation3]
    $region25: #{tpu_custom_call.1} parent=1 // pred_fallthru
      _
    // Predicated region
    $region26: #{tpu_custom_call.1} parent=1 // pred_check
      _
    $region27: #{tpu_custom_call.1} parent=1 // pred_check_branch
      %215 = sbr.rel (0) target = $region29
    $region28: #{tpu_custom_call.1} parent=1 // pred_region
      %216 = dma.done [#allocation3], 128
    $region29: #{tpu_custom_call.1} parent=1 // pred_fallthru
      _
    %217 = vsyncpa [#allocation3], 1

</llo_original>
